<compile_context>
chip_gen: v6e
topology: v6e:2x2x1
jax: 0.10.0
libtpu: 0.0.40
codegen_flags: <defaults>
</compile_context>

<pallas_src>
import math
import functools

import jax
import jax.numpy as jnp
import numpy as np
from jax import lax
from jax.experimental import pallas as pl
from jax.experimental.pallas import tpu as pltpu


def _build_positional_encoding(seq_len: int, emb_dim: int) -> jnp.ndarray:
    """Deterministic sin/cos PE table, shape (seq_len, 1, emb_dim) — same as the
    registered buffer in the PyTorch module."""
    positions = jnp.arange(seq_len, dtype=jnp.float32)[:, None]          # (S, 1)
    div_term = jnp.exp(
        jnp.arange(0, emb_dim, 2, dtype=jnp.float32)
        * (-math.log(10000.0) / emb_dim)
    )                                                                     # (E/2,)
    pe = jnp.zeros((seq_len, emb_dim), dtype=jnp.float32)
    pe = pe.at[:, 0::2].set(jnp.sin(positions * div_term))
    pe = pe.at[:, 1::2].set(jnp.cos(positions * div_term))
    return pe[:, None, :]                                                 # (S, 1, E)


def _pos_enc_kernel(seed_ref, x_ref, pe_ref, o_ref, *,
                    emb_scale: float, dropout_rate: float, rows_per_block: int):
    """out = dropout(x * emb_scale + pe), computed on one (TS, B, E) tile."""
    # f32 compute regardless of storage dtype; PE broadcasts (TS,1,E)->(TS,B,E).
    val = x_ref[...].astype(jnp.float32) * jnp.float32(emb_scale) + pe_ref[...]

    if dropout_rate > 0.0:
        ts, b, e = val.shape
        # Global flat element index (distinct per tile -> distinct mask per tile).
        row = lax.broadcasted_iota(jnp.int32, val.shape, 0) \
            + pl.program_id(0) * rows_per_block
        col = lax.broadcasted_iota(jnp.int32, val.shape, 1)
        lane = lax.broadcasted_iota(jnp.int32, val.shape, 2)
        idx = (row * b + col) * e + lane

        # murmur3 finalizer mix of (index + seed): integer-only VPU ops.
        h = idx.astype(jnp.uint32) + seed_ref[0].astype(jnp.uint32)
        h = h ^ (h >> jnp.uint32(16))
        h = h * jnp.uint32(0x85EBCA6B)
        h = h ^ (h >> jnp.uint32(13))
        h = h * jnp.uint32(0xC2B2AE35)
        h = h ^ (h >> jnp.uint32(16))

        # keep with prob (1 - p): compare top 24 bits against an int threshold
        # (no float conversion on the mask path).
        thr24 = jnp.int32(min((1 << 24) - 1, int(round(dropout_rate * (1 << 24)))))
        keep = (h >> jnp.uint32(8)).astype(jnp.int32) >= thr24

        inv_keep = jnp.float32(1.0 / (1.0 - dropout_rate))
        val = jnp.where(keep, val * inv_keep, jnp.float32(0.0))

    o_ref[...] = val.astype(o_ref.dtype)


def positional_encoding_forward(x: jnp.ndarray,
                                pe: jnp.ndarray,
                                seed: int,
                                emb_scale: float = 1.0,
                                dropout_rate: float = 0.1,
                                target_block_bytes: int = 2 * 1024 * 1024) -> jnp.ndarray:
    """x: (S, B, E); pe: (S_max, 1, E) f32.  Returns (S, B, E) in x.dtype."""
    S, B, E = x.shape
    pe_sliced = pe[:S]                                     # pe[:x.size(0)] — glue

    # Row-tile size: ~2 MiB of x per block keeps (in + out) * double-buffer well
    # under scoped VMEM on v5e/v6e/v7x while amortizing per-step overhead.
    itemsize = jnp.dtype(x.dtype).itemsize
    bytes_per_row = max(1, B * E * itemsize)
    block_rows = int(max(1, min(S, target_block_bytes // bytes_per_row)))
    grid = (pl.cdiv(S, block_rows),)

    seed_arr = jnp.array([seed], dtype=jnp.int32)
    kernel = functools.partial(_pos_enc_kernel,
                               emb_scale=float(emb_scale),
                               dropout_rate=float(dropout_rate),
                               rows_per_block=block_rows)

    return pl.pallas_call(
        kernel,
        out_shape=jax.ShapeDtypeStruct((S, B, E), x.dtype),
        grid_spec=pltpu.PrefetchScalarGridSpec(
            num_scalar_prefetch=1,                          # seed -> SMEM
            grid=grid,
            in_specs=[
                pl.BlockSpec((block_rows, B, E), lambda i, seed: (i, 0, 0)),  # x
                pl.BlockSpec((block_rows, 1, E), lambda i, seed: (i, 0, 0)),  # pe
            ],
            out_specs=pl.BlockSpec((block_rows, B, E), lambda i, seed: (i, 0, 0)),
        ),
        compiler_params=pltpu.CompilerParams(
            dimension_semantics=("parallel",),              # shard tiles on v7x 2-TC
        ),
    )(seed_arr, x, pe_sliced)


if __name__ == "__main__":
    # Small shapes consistent with the module; E=128 keeps stores lane-dense.
    SEQ_LEN, BATCH, EMB_DIM = 16, 8, 128
    EMB_SCALE = math.sqrt(EMB_DIM)
    DROPOUT_RATE = 0.1

    key = jax.random.PRNGKey(0)
    x = jax.random.normal(key, (SEQ_LEN, BATCH, EMB_DIM), dtype=jnp.float32)
    pe = _build_positional_encoding(SEQ_LEN, EMB_DIM)       # (S, 1, E)
    expected = np.asarray(x) * EMB_SCALE + np.asarray(pe)   # (S, B, E) via broadcast

    # Eval mode (dropout_rate=0): exact match against the reference.
    out_eval = positional_encoding_forward(x, pe, seed=0,
                                           emb_scale=EMB_SCALE, dropout_rate=0.0)
    out_eval = jax.block_until_ready(out_eval)
    np.testing.assert_allclose(np.asarray(out_eval), expected, rtol=1e-5, atol=1e-5)

    # Train mode: survivors equal expected/(1-p); dropped are exactly zero.
    out = positional_encoding_forward(x, pe, seed=1234,
                                      emb_scale=EMB_SCALE, dropout_rate=DROPOUT_RATE)
    out = jax.block_until_ready(out)
    out_np = np.asarray(out)
    assert out_np.shape == (SEQ_LEN, BATCH, EMB_DIM)
    assert np.isfinite(out_np).all()
    kept = out_np != 0.0
    np.testing.assert_allclose(
        out_np[kept], (expected / (1.0 - DROPOUT_RATE))[kept], rtol=1e-5, atol=1e-5
    )
    keep_frac = kept.mean()
    assert 0.80 < keep_frac < 0.97, f"unexpected keep fraction {keep_frac}"

    print("KERNEL_OK")
</pallas_src>

<mosaic_0001>
module attributes {stable_mosaic.version = 11 : i64} {
  func.func @_pos_enc_kernel(%arg0: i32, %arg1: memref<1xi32, #tpu.memory_space<smem>>, %arg2: memref<16x8x128xf32, #tpu.memory_space<vmem>>, %arg3: memref<16x1x128xf32, #tpu.memory_space<vmem>>, %arg4: memref<16x8x128xf32, #tpu.memory_space<vmem>>) attributes {dimension_semantics = [#tpu.dimension_semantics<parallel>], iteration_bounds = array<i64: 1>, scalar_prefetch = 1 : i64, scratch_operands = 0 : i64, tpu.core_type = #tpu.core_type<tc>, window_params = [{transform_indices = @transform_0, window_bounds = array<i64: 16, 8, 128>}, {transform_indices = @transform_1, window_bounds = array<i64: 16, 1, 128>}, {transform_indices = @transform_2, window_bounds = array<i64: 16, 8, 128>}]} {
    %c0 = arith.constant 0 : index
    %c0_0 = arith.constant 0 : index
    %c0_1 = arith.constant 0 : index
    %0 = vector.load %arg2[%c0, %c0_0, %c0_1] : memref<16x8x128xf32, #tpu.memory_space<vmem>>, vector<16x8x128xf32>
    %cst = arith.constant 11.3137083 : f32
    %1 = vector.broadcast %cst : f32 to vector<16x8x128xf32>
    %2 = arith.mulf %0, %1 : vector<16x8x128xf32>
    %c0_2 = arith.constant 0 : index
    %c0_3 = arith.constant 0 : index
    %c0_4 = arith.constant 0 : index
    %3 = vector.load %arg3[%c0_2, %c0_3, %c0_4] : memref<16x1x128xf32, #tpu.memory_space<vmem>>, vector<16x1x128xf32>
    %4 = vector.broadcast %3 : vector<16x1x128xf32> to vector<16x8x128xf32>
    %5 = arith.addf %2, %4 : vector<16x8x128xf32>
    %c0_5 = arith.constant 0 : index
    %c0_6 = arith.constant 0 : index
    %c0_7 = arith.constant 0 : index
    %6 = vector.load %arg4[%c0_5, %c0_6, %c0_7] : memref<16x8x128xf32, #tpu.memory_space<vmem>>, vector<16x8x128xf32>
    tpu.vector_store %arg4[%c0_5, %c0_6, %c0_7], %5 {strides = array<i32>} : memref<16x8x128xf32, #tpu.memory_space<vmem>>, vector<16x8x128xf32>,
    return
  }
  func.func @transform_0(%arg0: i32, %arg1: memref<1xi32, #tpu.memory_space<smem>>) -> (i32, i32, i32) {
    %c0_i32 = arith.constant 0 : i32
    %c0_i32_0 = arith.constant 0 : i32
    %c0_i32_1 = arith.constant 0 : i32
    return %arg0, %c0_i32, %c0_i32_0 : i32, i32, i32
  }
  func.func @transform_1(%arg0: i32, %arg1: memref<1xi32, #tpu.memory_space<smem>>) -> (i32, i32, i32) {
    %c0_i32 = arith.constant 0 : i32
    %c0_i32_0 = arith.constant 0 : i32
    %c0_i32_1 = arith.constant 0 : i32
    return %arg0, %c0_i32, %c0_i32_0 : i32, i32, i32
  }
  func.func @transform_2(%arg0: i32, %arg1: memref<1xi32, #tpu.memory_space<smem>>) -> (i32, i32, i32) {
    %c0_i32 = arith.constant 0 : i32
    %c0_i32_0 = arith.constant 0 : i32
    %c0_i32_1 = arith.constant 0 : i32
    return %arg0, %c0_i32, %c0_i32_0 : i32, i32, i32
  }
}

</mosaic_0001>

<llo_original>
// kernel: tpu_custom_call.1
$region0: #{tpu_custom_call.1}
  #allocation0 [shape = 'u32[]', space=smem, size = 0x4, offset = 0x4, fixed_abs, tag = 'smem constant byte address 0x4 - core index']
  #allocation1 [shape = 'u32[144,128]{1,0:T(1,128)}', space=vmem, size = 0x12000, scoped, tag = 'internal scratch']
  #allocation2 [shape = 's32[1]{0}', space=sflag, size = 0x4, scoped, tag = 'scoped memory for tpu_custom_call.1']
  #allocation3 [shape = 's32[1]{0:T(128)S(6)}', space=smem, size = 0x200, scoped, tag = 'prefetched SMEM operand 0']
  %s0 = inlined_call_operand.<no memory space> [shape: s32[1], index: 0, kind: input, shape index: {}]
  %s1 = inlined_call_operand.hbm [shape: f32[16,8,128], index: 1, kind: input, shape index: {}]
  %s2 = inlined_call_operand.hbm [shape: f32[16,1,128], index: 2, kind: input, shape index: {}]
  %s3 = inlined_call_operand.hbm [shape: f32[16,8,128], index: 3, kind: output, shape index: {}]
  %s4 = sld [smem:[#allocation0]]
  $region26: #{tpu_custom_call.1} parent=0
    _
  %s6 = ssub.s32 1, %s4
  %s7 = scalar_select 0, %s6, %s4
  %8 = sst [smem:[#allocation3]] %s0
  $region1: #{tpu_custom_call.1} parent=0
    #allocation4 [shape = 'u8[65536]{0}', space=vmem, size = 0x10000, scoped, tag = 'input window, operand 1, single buffered']
    #allocation5 [shape = 's32[1]{0}', space=sflag, size = 0x4, scoped, tag = 'scoped memory for tpu_custom_call.1']
    #allocation6 [shape = 's32[1]{0}', space=sflag, size = 0x4, scoped, tag = 'scoped memory for tpu_custom_call.1']
    #allocation7 [shape = 'u8[8192]{0}', space=vmem, size = 0x2000, scoped, tag = 'input window, operand 2, single buffered']
    #allocation8 [shape = 's32[1]{0}', space=sflag, size = 0x4, scoped, tag = 'scoped memory for tpu_custom_call.1']
    #allocation9 [shape = 'u8[65536]{0}', space=vmem, size = 0x10000, scoped, tag = 'output window, operand 0, single buffered']
    %9 = vsyncpa [#allocation5], 0
    %10 = vsyncpa [#allocation8], 0
    %11 = vsyncpa [#allocation6], 0
    // Predicated region
    $region2: #{tpu_custom_call.1} parent=1 // pred_check
      _
    $region3: #{tpu_custom_call.1} parent=1 // pred_check_branch
      %13 = sbr.rel (0) target = $region5
    $region4: #{tpu_custom_call.1} parent=1 // pred_region
      %s15 = ssub.s32 2048, 2048
      %16 = vsyncadd [#allocation5], %s15
      %s17 = sshll.u32 [#allocation4], 4
      %s18 = int_to_ptr.vmem [resolvable:$true] %s17
      %23 = dma.hbm_to_vmem [thread:$0]  %s1, 2048, %s18, [#allocation5], 128, 128, 8
    $region5: #{tpu_custom_call.1} parent=1 // pred_fallthru
      _
    // Predicated region
    $region6: #{tpu_custom_call.1} parent=1 // pred_check
      _
    $region7: #{tpu_custom_call.1} parent=1 // pred_check_branch
      %25 = sbr.rel (0) target = $region9
    $region8: #{tpu_custom_call.1} parent=1 // pred_region
      %s27 = ssub.s32 256, 256
      %28 = vsyncadd [#allocation8], %s27
      %s29 = sshll.u32 [#allocation7], 4
      %s30 = int_to_ptr.vmem [resolvable:$true] %s29
      %35 = dma.hbm_to_vmem [thread:$0]  %s2, 256, %s30, [#allocation8], 16, 16, 1
    $region9: #{tpu_custom_call.1} parent=1 // pred_fallthru
      _
    // Predicated region
    $region10: #{tpu_custom_call.1} parent=1 // pred_check
      _
    $region11: #{tpu_custom_call.1} parent=1 // pred_check_branch
      %37 = sbr.rel (0) target = $region13
    $region12: #{tpu_custom_call.1} parent=1 // pred_region
      %38 = dma.done [#allocation5], 2048
    $region13: #{tpu_custom_call.1} parent=1 // pred_fallthru
      _
    // Predicated region
    $region14: #{tpu_custom_call.1} parent=1 // pred_check
      _
    $region15: #{tpu_custom_call.1} parent=1 // pred_check_branch
      %40 = sbr.rel (0) target = $region17
    $region16: #{tpu_custom_call.1} parent=1 // pred_region
      %41 = dma.done [#allocation8], 256
    $region17: #{tpu_custom_call.1} parent=1 // pred_fallthru
      _
    %v42 = vld [vmem:[#allocation4] sm:$0xff]
    %v43 = vld [vmem:[#allocation4 + $0x8] sm:$0xff]
    %v44 = vld [vmem:[#allocation4 + $0x10] sm:$0xff]
    %v45 = vld [vmem:[#allocation4 + $0x18] sm:$0xff]
    %v46 = vld [vmem:[#allocation4 + $0x20] sm:$0xff]
    %v47 = vld [vmem:[#allocation4 + $0x28] sm:$0xff]
    %v48 = vld [vmem:[#allocation4 + $0x30] sm:$0xff]
    %v49 = vld [vmem:[#allocation4 + $0x38] sm:$0xff]
    %v50 = vld [vmem:[#allocation4 + $0x40] sm:$0xff]
    %v51 = vld [vmem:[#allocation4 + $0x48] sm:$0xff]
    %v52 = vld [vmem:[#allocation4 + $0x50] sm:$0xff]
    %v53 = vld [vmem:[#allocation4 + $0x58] sm:$0xff]
    %v54 = vld [vmem:[#allocation4 + $0x60] sm:$0xff]
    %v55 = vld [vmem:[#allocation4 + $0x68] sm:$0xff]
    %v56 = vld [vmem:[#allocation4 + $0x70] sm:$0xff]
    %v57 = vld [vmem:[#allocation4 + $0x78] sm:$0xff]
    %v58 = vmul.f32 %v42, 11.313708
    %v59 = vmul.f32 %v43, 11.313708
    %v60 = vmul.f32 %v44, 11.313708
    %v61 = vmul.f32 %v45, 11.313708
    %v62 = vmul.f32 %v46, 11.313708
    %v63 = vmul.f32 %v47, 11.313708
    %v64 = vmul.f32 %v48, 11.313708
    %v65 = vmul.f32 %v49, 11.313708
    %v66 = vmul.f32 %v50, 11.313708
    %v67 = vmul.f32 %v51, 11.313708
    %v68 = vmul.f32 %v52, 11.313708
    %v69 = vmul.f32 %v53, 11.313708
    %v70 = vmul.f32 %v54, 11.313708
    %v71 = vmul.f32 %v55, 11.313708
    %v72 = vmul.f32 %v56, 11.313708
    %v73 = vmul.f32 %v57, 11.313708
    %v74 = vld [vmem:[#allocation7] sm:$0x1]
    %v75 = vld [vmem:[#allocation7 + $0x1] sm:$0x1]
    %v76 = vld [vmem:[#allocation7 + $0x2] sm:$0x1]
    %v77 = vld [vmem:[#allocation7 + $0x3] sm:$0x1]
    %v78 = vld [vmem:[#allocation7 + $0x4] sm:$0x1]
    %v79 = vld [vmem:[#allocation7 + $0x5] sm:$0x1]
    %v80 = vld [vmem:[#allocation7 + $0x6] sm:$0x1]
    %v81 = vld [vmem:[#allocation7 + $0x7] sm:$0x1]
    %v82 = vld [vmem:[#allocation7 + $0x8] sm:$0x1]
    %v83 = vld [vmem:[#allocation7 + $0x9] sm:$0x1]
    %v84 = vld [vmem:[#allocation7 + $0xa] sm:$0x1]
    %v85 = vld [vmem:[#allocation7 + $0xb] sm:$0x1]
    %v86 = vld [vmem:[#allocation7 + $0xc] sm:$0x1]
    %v87 = vld [vmem:[#allocation7 + $0xd] sm:$0x1]
    %v88 = vld [vmem:[#allocation7 + $0xe] sm:$0x1]
    %v89 = vld [vmem:[#allocation7 + $0xf] sm:$0x1]
    %v106 = vlaneseq
    %v107 = vshrl.u32 %v106, 7
    %v108 = vsub.s32 0, %v107
    %v109 = vrot.slane %v74, %v108
    %v110 = vlaneseq
    %v111 = vshrl.u32 %v110, 7
    %v112 = vsub.s32 0, %v111
    %v113 = vrot.slane %v75, %v112
    %v114 = vlaneseq
    %v115 = vshrl.u32 %v114, 7
    %v116 = vsub.s32 0, %v115
    %v117 = vrot.slane %v76, %v116
    %v118 = vlaneseq
    %v119 = vshrl.u32 %v118, 7
    %v120 = vsub.s32 0, %v119
    %v121 = vrot.slane %v77, %v120
    %v122 = vlaneseq
    %v123 = vshrl.u32 %v122, 7
    %v124 = vsub.s32 0, %v123
    %v125 = vrot.slane %v78, %v124
    %v126 = vlaneseq
    %v127 = vshrl.u32 %v126, 7
    %v128 = vsub.s32 0, %v127
    %v129 = vrot.slane %v79, %v128
    %v130 = vlaneseq
    %v131 = vshrl.u32 %v130, 7
    %v132 = vsub.s32 0, %v131
    %v133 = vrot.slane %v80, %v132
    %v134 = vlaneseq
    %v135 = vshrl.u32 %v134, 7
    %v136 = vsub.s32 0, %v135
    %v137 = vrot.slane %v81, %v136
    %v138 = vlaneseq
    %v139 = vshrl.u32 %v138, 7
    %v140 = vsub.s32 0, %v139
    %v141 = vrot.slane %v82, %v140
    %v142 = vlaneseq
    %v143 = vshrl.u32 %v142, 7
    %v144 = vsub.s32 0, %v143
    %v145 = vrot.slane %v83, %v144
    %v146 = vlaneseq
    %v147 = vshrl.u32 %v146, 7
    %v148 = vsub.s32 0, %v147
    %v149 = vrot.slane %v84, %v148
    %v150 = vlaneseq
    %v151 = vshrl.u32 %v150, 7
    %v152 = vsub.s32 0, %v151
    %v153 = vrot.slane %v85, %v152
    %v154 = vlaneseq
    %v155 = vshrl.u32 %v154, 7
    %v156 = vsub.s32 0, %v155
    %v157 = vrot.slane %v86, %v156
    %v158 = vlaneseq
    %v159 = vshrl.u32 %v158, 7
    %v160 = vsub.s32 0, %v159
    %v161 = vrot.slane %v87, %v160
    %v162 = vlaneseq
    %v163 = vshrl.u32 %v162, 7
    %v164 = vsub.s32 0, %v163
    %v165 = vrot.slane %v88, %v164
    %v166 = vlaneseq
    %v167 = vshrl.u32 %v166, 7
    %v168 = vsub.s32 0, %v167
    %v169 = vrot.slane %v89, %v168
    %v186 = vadd.f32 %v58, %v109
    %v187 = vadd.f32 %v59, %v113
    %v188 = vadd.f32 %v60, %v117
    %v189 = vadd.f32 %v61, %v121
    %v190 = vadd.f32 %v62, %v125
    %v191 = vadd.f32 %v63, %v129
    %v192 = vadd.f32 %v64, %v133
    %v193 = vadd.f32 %v65, %v137
    %v194 = vadd.f32 %v66, %v141
    %v195 = vadd.f32 %v67, %v145
    %v196 = vadd.f32 %v68, %v149
    %v197 = vadd.f32 %v69, %v153
    %v198 = vadd.f32 %v70, %v157
    %v199 = vadd.f32 %v71, %v161
    %v200 = vadd.f32 %v72, %v165
    %v201 = vadd.f32 %v73, %v169
    %202 = vst [vmem:[#allocation9] sm:$0xff] %v186
    %203 = vst [vmem:[#allocation9 + $0x8] sm:$0xff] %v187
    %204 = vst [vmem:[#allocation9 + $0x10] sm:$0xff] %v188
    %205 = vst [vmem:[#allocation9 + $0x18] sm:$0xff] %v189
    %206 = vst [vmem:[#allocation9 + $0x20] sm:$0xff] %v190
    %207 = vst [vmem:[#allocation9 + $0x28] sm:$0xff] %v191
    %208 = vst [vmem:[#allocation9 + $0x30] sm:$0xff] %v192
    %209 = vst [vmem:[#allocation9 + $0x38] sm:$0xff] %v193
    %210 = vst [vmem:[#allocation9 + $0x40] sm:$0xff] %v194
    %211 = vst [vmem:[#allocation9 + $0x48] sm:$0xff] %v195
    %212 = vst [vmem:[#allocation9 + $0x50] sm:$0xff] %v196
    %213 = vst [vmem:[#allocation9 + $0x58] sm:$0xff] %v197
    %214 = vst [vmem:[#allocation9 + $0x60] sm:$0xff] %v198
    %215 = vst [vmem:[#allocation9 + $0x68] sm:$0xff] %v199
    %216 = vst [vmem:[#allocation9 + $0x70] sm:$0xff] %v200
    %217 = vst [vmem:[#allocation9 + $0x78] sm:$0xff] %v201
    // Predicated region
    $region18: #{tpu_custom_call.1} parent=1 // pred_check
      _
    $region19: #{tpu_custom_call.1} parent=1 // pred_check_branch
      %219 = sbr.rel (0) target = $region21
    $region20: #{tpu_custom_call.1} parent=1 // pred_region
      %s221 = ssub.s32 2048, 2048
      %222 = vsyncadd [#allocation6], %s221
      %s223 = sshll.u32 [#allocation9], 4
      %s224 = int_to_ptr.vmem [resolvable:$true] %s223
      %229 = dma.vmem_to_hbm [thread:$0]  %s224, 2048, %s3, [#allocation6], 128, 128, 8
    $region21: #{tpu_custom_call.1} parent=1 // pred_fallthru
      _
    // Predicated region
    $region22: #{tpu_custom_call.1} parent=1 // pred_check
      _
    $region23: #{tpu_custom_call.1} parent=1 // pred_check_branch
      %231 = sbr.rel (0) target = $region25
    $region24: #{tpu_custom_call.1} parent=1 // pred_region
      %232 = dma.done [#allocation6], 2048
    $region25: #{tpu_custom_call.1} parent=1 // pred_fallthru
      _
    %233 = vsyncpa [#allocation5], 1
    %234 = vsyncpa [#allocation8], 1
    %235 = vsyncpa [#allocation6], 1

</llo_original>
